<compile_context>
chip_gen: v5e
topology: v5e:2x2
jax: 0.10.0
libtpu: 0.0.40
codegen_flags: <defaults>
</compile_context>

<pallas_src>
import jax
import jax.numpy as jnp
import numpy as np
from jax.experimental import pallas as pl
from jax.experimental.pallas import tpu as pltpu


def _round_up(x, m):
    return ((x + m - 1) // m) * m


def mean_encoder_kernel(tokens_ref, lengths_ref, emb_ref, out_ref, acc_ref):
    """Grid = (B_tiles, V_tiles). V (axis 1) is the reduction axis.

    tokens_ref : [tB, L]   int32  (zero-padded token ids, position 0 = <start>)
    lengths_ref: [tB, 1]   int32  (true length incl. <start> and <end>; 0 = pad row)
    emb_ref    : [tV, D]   f32    (one streamed vocab tile of the embedding table)
    out_ref    : [tB, D]   f32
    acc_ref    : [tB, D]   f32    (VMEM scratch, persists across the V axis)
    """
    k = pl.program_id(1)

    @pl.when(k == 0)
    def _init():
        acc_ref[...] = jnp.zeros_like(acc_ref)

    tokens = tokens_ref[...]                       # [tB, L]
    lengths = lengths_ref[...]                     # [tB, 1]
    tB, L = tokens.shape
    tV = emb_ref.shape[0]

    # Valid positions: 1 <= pos < length (exclude <start>, exclude padding; pad
    # rows have length 0 -> everything masked).  Masked tokens become -1, which
    # never matches any (non-negative) vocab id, so the count loop below needs no
    # per-iteration mask logic.
    pos = jax.lax.broadcasted_iota(jnp.int32, (tB, L), 1)
    keep = jnp.logical_and(pos >= 1, pos < lengths)
    tok_m = jnp.where(keep, tokens, jnp.int32(-1))

    # Vocab ids covered by this V-tile.
    vocab_ids = jax.lax.broadcasted_iota(jnp.int32, (tB, tV), 1) + k * tV

    # Accumulate per-vocab counts over positions 1..L-1.  Static Python loop ==
    # fully unrolled with *static* lane slices; only a [tB, tV] slab is live.
    counts = jnp.zeros((tB, tV), jnp.float32)
    for l in range(1, L):
        counts = counts + (tok_m[:, l:l + 1] == vocab_ids).astype(jnp.float32)

    # Gather-free embedding sum: counts @ emb_tile on the MXU, accumulated in place.
    acc_ref[...] += jnp.dot(counts, emb_ref[...], preferred_element_type=jnp.float32)

    @pl.when(k == pl.num_programs(1) - 1)
    def _finalize():
        # Torch divides by the FULL length (including the excluded <start> token).
        # max(len, 1) guards padded rows / pathological length-0 sentences.
        len_f = jnp.maximum(lengths, 1).astype(jnp.float32)   # [tB, 1]
        inv = 1.0 / len_f                                      # tB divides, not tB*D
        out_ref[...] = (acc_ref[...] * inv).astype(out_ref.dtype)


def mean_encoder(tokens, lengths, emb_table, *, tile_b=128, tile_v=512):
    """tokens: [B, L] int, lengths: [B] int, emb_table: [V, D] float -> [B, D] f32."""
    B, L = tokens.shape
    V, D = emb_table.shape

    # Lane-dense output: pad D to a multiple of 128 (avoids masked vst on stores).
    D_pad = _round_up(D, 128)
    # Batch tile: MXU-sized (>=128) at real sizes, shrunk (sublane-aligned) for toy B.
    tB = tile_b if B >= tile_b else _round_up(B, 8)
    B_pad = _round_up(B, tB)
    # Vocab (contraction) tile: multiple of 256 for v6e/v7x MXU; shrunk for toy V.
    tV = tile_v if V >= tile_v else _round_up(V, 256)
    V_pad = _round_up(V, tV)

    tokens_p = jnp.zeros((B_pad, L), jnp.int32).at[:B].set(tokens.astype(jnp.int32))
    lengths_p = jnp.zeros((B_pad, 1), jnp.int32).at[:B, 0].set(lengths.astype(jnp.int32))
    if (V_pad, D_pad) == (V, D):
        emb_p = emb_table.astype(jnp.float32)
    else:
        emb_p = jnp.zeros((V_pad, D_pad), jnp.float32).at[:V, :D].set(
            emb_table.astype(jnp.float32))

    grid = (B_pad // tB, V_pad // tV)

    # Explicit VMEM budget (keep it modest so the same tiling survives v7x's 64 MiB).
    vmem_bytes = (2 * tV * D_pad * 4        # emb tiles, double-buffered
                  + 2 * tB * L * 4          # tokens tiles
                  + 2 * tB * 4              # lengths tiles
                  + 2 * tB * D_pad * 4      # output tiles
                  + tB * D_pad * 4          # accumulator scratch
                  + 2 * tB * tV * 4)        # counts / mask temporaries
    vmem_limit = int(min(max(4 * vmem_bytes, 8 * 1024 * 1024), 48 * 1024 * 1024))

    cost = pl.CostEstimate(
        flops=2 * B_pad * V_pad * D_pad,
        transcendentals=0,
        bytes_accessed=(V_pad * D_pad * 4 + B_pad * L * 4 + B_pad * 4
                        + B_pad * D_pad * 4),
    )

    out = pl.pallas_call(
        mean_encoder_kernel,
        out_shape=jax.ShapeDtypeStruct((B_pad, D_pad), jnp.float32),
        grid_spec=pltpu.PrefetchScalarGridSpec(
            num_scalar_prefetch=0,
            grid=grid,
            in_specs=[
                pl.BlockSpec((tB, L), lambda b, k: (b, 0)),        # tokens: per B-tile
                pl.BlockSpec((tB, 1), lambda b, k: (b, 0)),        # lengths: per B-tile
                pl.BlockSpec((tV, D_pad), lambda b, k: (k, 0)),    # emb: streamed V-tiles
            ],
            out_specs=pl.BlockSpec((tB, D_pad), lambda b, k: (b, 0)),
            scratch_shapes=[pltpu.VMEM((tB, D_pad), jnp.float32)],
        ),
        compiler_params=pltpu.CompilerParams(
            dimension_semantics=("parallel", "arbitrary"),
            vmem_limit_bytes=vmem_limit,
        ),
        cost_estimate=cost,
    )(tokens_p, lengths_p, emb_p)

    return out[:B, :D]


if __name__ == "__main__":
    # Small shapes consistent with the module: batch=4, max seq len=8,
    # vocab=32, word_emb_dim=32.
    B, L, V, D = 4, 8, 32, 32

    key = jax.random.PRNGKey(0)
    k_emb, k_tok = jax.random.split(key)

    # Deterministic "nn.Embedding" weights.
    emb_table = jax.random.normal(k_emb, (V, D), dtype=jnp.float32)

    # Synthetic tokenized sentences (would come from WordEncoder.encode()):
    # position 0 is <start>, last real token is <end>; rest is zero padding.
    # TODO(synk): WordEncoder's string tokenization is host-side Python; not a kernel.
    lengths_np = np.array([8, 5, 3, 7], dtype=np.int32)
    tokens_np = np.array(
        jax.random.randint(k_tok, (B, L), minval=2, maxval=V, dtype=jnp.int32),
        copy=True)
    tokens_np[:, 0] = 1                       # <start> id
    for b in range(B):
        tokens_np[b, lengths_np[b] - 1] = 0   # <end> id
        tokens_np[b, lengths_np[b]:] = 0      # padding

    tokens = jnp.asarray(tokens_np)
    lengths = jnp.asarray(lengths_np)

    out = jax.block_until_ready(mean_encoder(tokens, lengths, emb_table))

    # Pure-numpy reference of the torch semantics (cumsum-diff == masked sum).
    emb_np = np.array(emb_table)
    gathered = emb_np[tokens_np]                                   # [B, L, D]
    pos = np.arange(L)[None, :]
    mask = (pos >= 1) & (pos < lengths_np[:, None])
    ref = (gathered * mask[:, :, None]).sum(axis=1) / lengths_np[:, None].astype(np.float32)

    np.testing.assert_allclose(np.asarray(out), ref, rtol=1e-5, atol=1e-5)
    print("KERNEL_OK")
</pallas_src>

<mosaic_0001>
module attributes {stable_mosaic.version = 11 : i64} {
  func.func @mean_encoder_kernel(%arg0: i32, %arg1: i32, %arg2: memref<8x8xi32, #tpu.memory_space<vmem>>, %arg3: memref<8x1xi32, #tpu.memory_space<vmem>>, %arg4: memref<256x128xf32, #tpu.memory_space<vmem>>, %arg5: memref<8x128xf32, #tpu.memory_space<vmem>>, %arg6: memref<8x128xf32, #tpu.memory_space<vmem>>) attributes {dimension_semantics = [#tpu.dimension_semantics<parallel>, #tpu.dimension_semantics<arbitrary>], iteration_bounds = array<i64: 1, 1>, scalar_prefetch = 0 : i64, scratch_operands = 1 : i64, tpu.core_type = #tpu.core_type<tc>, window_params = [{transform_indices = @transform_0, window_bounds = array<i64: 8, 8>}, {transform_indices = @transform_1, window_bounds = array<i64: 8, 1>}, {transform_indices = @transform_2, window_bounds = array<i64: 256, 128>}, {transform_indices = @transform_3, window_bounds = array<i64: 8, 128>}]} {
    %c0_i32 = arith.constant 0 : i32
    %0 = arith.cmpi eq, %arg1, %c0_i32 : i32
    %1 = arith.extui %0 : i1 to i32
    %c0_i32_0 = arith.constant 0 : i32
    %2 = arith.cmpi ne, %1, %c0_i32_0 : i32
    scf.if %2 {
      %cst_13 = arith.constant 0.000000e+00 : f32
      %68 = vector.broadcast %cst_13 : f32 to vector<8x128xf32>
      %c0_14 = arith.constant 0 : index
      %c0_15 = arith.constant 0 : index
      %69 = vector.load %arg6[%c0_14, %c0_15] : memref<8x128xf32, #tpu.memory_space<vmem>>, vector<8x128xf32>
      tpu.vector_store %arg6[%c0_14, %c0_15], %68 {strides = array<i32>} : memref<8x128xf32, #tpu.memory_space<vmem>>, vector<8x128xf32>,
    } else {
    }
    %c0 = arith.constant 0 : index
    %c0_1 = arith.constant 0 : index
    %3 = vector.load %arg2[%c0, %c0_1] : memref<8x8xi32, #tpu.memory_space<vmem>>, vector<8x8xi32>
    %c0_2 = arith.constant 0 : index
    %c0_3 = arith.constant 0 : index
    %4 = vector.load %arg3[%c0_2, %c0_3] : memref<8x1xi32, #tpu.memory_space<vmem>>, vector<8x1xi32>
    %5 = tpu.iota {dimensions = array<i32: 1>} : vector<8x8xi32>
    %c1_i32 = arith.constant 1 : i32
    %6 = vector.broadcast %c1_i32 : i32 to vector<8x8xi32>
    %7 = arith.cmpi sge, %5, %6 : vector<8x8xi32>
    %8 = vector.broadcast %4 : vector<8x1xi32> to vector<8x8xi32>
    %9 = arith.cmpi slt, %5, %8 : vector<8x8xi32>
    %10 = arith.andi %7, %9 : vector<8x8xi1>
    %c-1_i32 = arith.constant -1 : i32
    %11 = vector.broadcast %c-1_i32 : i32 to vector<8x8xi32>
    %12 = arith.select %10, %3, %11 : vector<8x8xi1>, vector<8x8xi32>
    %13 = tpu.iota {dimensions = array<i32: 1>} : vector<8x256xi32>
    %c256_i32 = arith.constant 256 : i32
    %14 = arith.muli %arg1, %c256_i32 : i32
    %15 = vector.broadcast %14 : i32 to vector<8x256xi32>
    %16 = arith.addi %13, %15 : vector<8x256xi32>
    %cst = arith.constant 0.000000e+00 : f32
    %17 = vector.broadcast %cst : f32 to vector<8x256xf32>
    %18 = vector.extract_strided_slice %12 {offsets = [0, 1], sizes = [8, 1], strides = [1, 1]} : vector<8x8xi32> to vector<8x1xi32>
    %19 = vector.broadcast %18 : vector<8x1xi32> to vector<8x256xi32>
    %20 = arith.cmpi eq, %19, %16 : vector<8x256xi32>
    %21 = arith.extui %20 : vector<8x256xi1> to vector<8x256xi32>
    %22 = arith.sitofp %21 : vector<8x256xi32> to vector<8x256xf32>
    %23 = arith.addf %17, %22 : vector<8x256xf32>
    %24 = vector.extract_strided_slice %12 {offsets = [0, 2], sizes = [8, 1], strides = [1, 1]} : vector<8x8xi32> to vector<8x1xi32>
    %25 = vector.broadcast %24 : vector<8x1xi32> to vector<8x256xi32>
    %26 = arith.cmpi eq, %25, %16 : vector<8x256xi32>
    %27 = arith.extui %26 : vector<8x256xi1> to vector<8x256xi32>
    %28 = arith.sitofp %27 : vector<8x256xi32> to vector<8x256xf32>
    %29 = arith.addf %23, %28 : vector<8x256xf32>
    %30 = vector.extract_strided_slice %12 {offsets = [0, 3], sizes = [8, 1], strides = [1, 1]} : vector<8x8xi32> to vector<8x1xi32>
    %31 = vector.broadcast %30 : vector<8x1xi32> to vector<8x256xi32>
    %32 = arith.cmpi eq, %31, %16 : vector<8x256xi32>
    %33 = arith.extui %32 : vector<8x256xi1> to vector<8x256xi32>
    %34 = arith.sitofp %33 : vector<8x256xi32> to vector<8x256xf32>
    %35 = arith.addf %29, %34 : vector<8x256xf32>
    %36 = vector.extract_strided_slice %12 {offsets = [0, 4], sizes = [8, 1], strides = [1, 1]} : vector<8x8xi32> to vector<8x1xi32>
    %37 = vector.broadcast %36 : vector<8x1xi32> to vector<8x256xi32>
    %38 = arith.cmpi eq, %37, %16 : vector<8x256xi32>
    %39 = arith.extui %38 : vector<8x256xi1> to vector<8x256xi32>
    %40 = arith.sitofp %39 : vector<8x256xi32> to vector<8x256xf32>
    %41 = arith.addf %35, %40 : vector<8x256xf32>
    %42 = vector.extract_strided_slice %12 {offsets = [0, 5], sizes = [8, 1], strides = [1, 1]} : vector<8x8xi32> to vector<8x1xi32>
    %43 = vector.broadcast %42 : vector<8x1xi32> to vector<8x256xi32>
    %44 = arith.cmpi eq, %43, %16 : vector<8x256xi32>
    %45 = arith.extui %44 : vector<8x256xi1> to vector<8x256xi32>
    %46 = arith.sitofp %45 : vector<8x256xi32> to vector<8x256xf32>
    %47 = arith.addf %41, %46 : vector<8x256xf32>
    %48 = vector.extract_strided_slice %12 {offsets = [0, 6], sizes = [8, 1], strides = [1, 1]} : vector<8x8xi32> to vector<8x1xi32>
    %49 = vector.broadcast %48 : vector<8x1xi32> to vector<8x256xi32>
    %50 = arith.cmpi eq, %49, %16 : vector<8x256xi32>
    %51 = arith.extui %50 : vector<8x256xi1> to vector<8x256xi32>
    %52 = arith.sitofp %51 : vector<8x256xi32> to vector<8x256xf32>
    %53 = arith.addf %47, %52 : vector<8x256xf32>
    %54 = vector.extract_strided_slice %12 {offsets = [0, 7], sizes = [8, 1], strides = [1, 1]} : vector<8x8xi32> to vector<8x1xi32>
    %55 = vector.broadcast %54 : vector<8x1xi32> to vector<8x256xi32>
    %56 = arith.cmpi eq, %55, %16 : vector<8x256xi32>
    %57 = arith.extui %56 : vector<8x256xi1> to vector<8x256xi32>
    %58 = arith.sitofp %57 : vector<8x256xi32> to vector<8x256xf32>
    %59 = arith.addf %53, %58 : vector<8x256xf32>
    %c0_4 = arith.constant 0 : index
    %c0_5 = arith.constant 0 : index
    %60 = vector.load %arg6[%c0_4, %c0_5] : memref<8x128xf32, #tpu.memory_space<vmem>>, vector<8x128xf32>
    %c0_6 = arith.constant 0 : index
    %c0_7 = arith.constant 0 : index
    %61 = vector.load %arg4[%c0_6, %c0_7] : memref<256x128xf32, #tpu.memory_space<vmem>>, vector<256x128xf32>
    %cst_8 = arith.constant dense<0.000000e+00> : vector<8x128xf32>
    %62 = tpu.matmul %59, %61, %cst_8 {dimension_numbers = #tpu.dot_dimension_numbers<[1], [0], [0], [1], [0, 0, 1, 1], [], []>} : vector<8x256xf32>, vector<256x128xf32>, vector<8x128xf32> -> vector<8x128xf32>
    %63 = arith.addf %60, %62 : vector<8x128xf32>
    %c0_9 = arith.constant 0 : index
    %c0_10 = arith.constant 0 : index
    %64 = vector.load %arg6[%c0_9, %c0_10] : memref<8x128xf32, #tpu.memory_space<vmem>>, vector<8x128xf32>
    tpu.vector_store %arg6[%c0_9, %c0_10], %63 {strides = array<i32>} : memref<8x128xf32, #tpu.memory_space<vmem>>, vector<8x128xf32>,
    %c0_i32_11 = arith.constant 0 : i32
    %65 = arith.cmpi eq, %arg1, %c0_i32_11 : i32
    %66 = arith.extui %65 : i1 to i32
    %c0_i32_12 = arith.constant 0 : i32
    %67 = arith.cmpi ne, %66, %c0_i32_12 : i32
    scf.if %67 {
      %c1_i32_13 = arith.constant 1 : i32
      %68 = vector.broadcast %c1_i32_13 : i32 to vector<8x1xi32>
      %69 = arith.maxsi %4, %68 : vector<8x1xi32>
      %70 = arith.sitofp %69 : vector<8x1xi32> to vector<8x1xf32>
      %cst_14 = arith.constant 1.000000e+00 : f32
      %71 = vector.broadcast %cst_14 : f32 to vector<8x1xf32>
      %72 = arith.divf %71, %70 : vector<8x1xf32>
      %c0_15 = arith.constant 0 : index
      %c0_16 = arith.constant 0 : index
      %73 = vector.load %arg6[%c0_15, %c0_16] : memref<8x128xf32, #tpu.memory_space<vmem>>, vector<8x128xf32>
      %74 = vector.broadcast %72 : vector<8x1xf32> to vector<8x128xf32>
      %75 = arith.mulf %73, %74 : vector<8x128xf32>
      %c0_17 = arith.constant 0 : index
      %c0_18 = arith.constant 0 : index
      %76 = vector.load %arg5[%c0_17, %c0_18] : memref<8x128xf32, #tpu.memory_space<vmem>>, vector<8x128xf32>
      tpu.vector_store %arg5[%c0_17, %c0_18], %75 {strides = array<i32>} : memref<8x128xf32, #tpu.memory_space<vmem>>, vector<8x128xf32>,
    } else {
    }
    return
  }
  func.func @transform_0(%arg0: i32, %arg1: i32) -> (i32, i32) {
    %c0_i32 = arith.constant 0 : i32
    %c0_i32_0 = arith.constant 0 : i32
    return %arg0, %c0_i32 : i32, i32
  }
  func.func @transform_1(%arg0: i32, %arg1: i32) -> (i32, i32) {
    %c0_i32 = arith.constant 0 : i32
    %c0_i32_0 = arith.constant 0 : i32
    return %arg0, %c0_i32 : i32, i32
  }
  func.func @transform_2(%arg0: i32, %arg1: i32) -> (i32, i32) {
    %c0_i32 = arith.constant 0 : i32
    %c0_i32_0 = arith.constant 0 : i32
    return %arg1, %c0_i32 : i32, i32
  }
  func.func @transform_3(%arg0: i32, %arg1: i32) -> (i32, i32) {
    %c0_i32 = arith.constant 0 : i32
    %c0_i32_0 = arith.constant 0 : i32
    return %arg0, %c0_i32 : i32, i32
  }
}

</mosaic_0001>

<llo_original>
// kernel: tpu_custom_call.1
$region0: #{tpu_custom_call.1}
  #allocation0 [shape = 'u32[]', space=smem, size = 0x4, offset = 0x4, fixed_abs, tag = 'smem constant byte address 0x4 - core index']
  #allocation1 [shape = 'u32[72,128]{1,0:T(1,128)}', space=vmem, size = 0x9000, scoped, tag = 'internal scratch']
  #allocation2 [shape = 'f32[8,128]{1,0:T(8,128)}', space=vmem, size = 0x1000, scoped, tag = 'scratch operand']
  %s0 = inlined_call_operand.vmem [shape: s32[8,8], index: 0, kind: input, shape index: {}]
  %s1 = inlined_call_operand.vmem [shape: s32[8,1], index: 1, kind: input, shape index: {}]
  %s2 = inlined_call_operand.hbm [shape: f32[256,128], index: 2, kind: input, shape index: {}]
  %s3 = inlined_call_operand.hbm [shape: f32[8,128], index: 3, kind: output, shape index: {}]
  %s4 = sld [smem:[#allocation0]]
  $region34: #{tpu_custom_call.1} parent=0
    _
  %s6 = ssub.s32 1, %s4
  %s7 = scalar_select 0, %s6, %s4
  $region1: #{tpu_custom_call.1} parent=0
    #allocation3 [shape = 'u8[131072]{0}', space=vmem, size = 0x20000, scoped, tag = 'input window, operand 2, single buffered']
    #allocation4 [shape = 's32[1]{0}', space=sflag, size = 0x4, scoped, tag = 'scoped memory for tpu_custom_call.1']
    #allocation5 [shape = 's32[1]{0}', space=sflag, size = 0x4, scoped, tag = 'scoped memory for tpu_custom_call.1']
    #allocation6 [shape = 'u8[4096]{0}', space=vmem, size = 0x1000, scoped, tag = 'output window, operand 0, single buffered']
    %8 = vsyncpa [#allocation4], 0
    %9 = vsyncpa [#allocation5], 0
    // Predicated region
    $region2: #{tpu_custom_call.1} parent=1 // pred_check
      _
    $region3: #{tpu_custom_call.1} parent=1 // pred_check_branch
      %11 = sbr.rel (0) target = $region5
    $region4: #{tpu_custom_call.1} parent=1 // pred_region
      _
    $region5: #{tpu_custom_call.1} parent=1 // pred_fallthru
      _
    // Predicated region
    $region6: #{tpu_custom_call.1} parent=1 // pred_check
      _
    $region7: #{tpu_custom_call.1} parent=1 // pred_check_branch
      %13 = sbr.rel (0) target = $region9
    $region8: #{tpu_custom_call.1} parent=1 // pred_region
      _
    $region9: #{tpu_custom_call.1} parent=1 // pred_fallthru
      _
    // Predicated region
    $region10: #{tpu_custom_call.1} parent=1 // pred_check
      _
    $region11: #{tpu_custom_call.1} parent=1 // pred_check_branch
      %15 = sbr.rel (0) target = $region13
    $region12: #{tpu_custom_call.1} parent=1 // pred_region
      %17 = vsyncadd [#allocation4], 0
      %s18 = sshll.u32 %s2, 4
      %s19 = int_to_ptr.hbm [resolvable:$true] %s18
      %s20 = sshll.u32 [#allocation3], 4
      %s21 = int_to_ptr.vmem [resolvable:$true] %s20
      %26 = dma.hbm_to_vmem [thread:$0]  %s19, 4096, %s21, [#allocation4], 128, 128, 8
    $region13: #{tpu_custom_call.1} parent=1 // pred_fallthru
      _
    // Predicated region
    $region14: #{tpu_custom_call.1} parent=1 // pred_check
      _
    $region15: #{tpu_custom_call.1} parent=1 // pred_check_branch
      %28 = sbr.rel (0) target = $region17
    $region16: #{tpu_custom_call.1} parent=1 // pred_region
      %30 = dma.done [#allocation4], 4096
    $region17: #{tpu_custom_call.1} parent=1 // pred_fallthru
      _
    %p31 = scmp.eq.s32.totalorder 0, 0
    // Predicated region
    $region18: #{tpu_custom_call.1} parent=1 // pred_check
      %p32 = pneg %p31
    $region19: #{tpu_custom_call.1} parent=1 // pred_check_branch
      %34 = sbr.rel (%p32) target = $region21
    $region20: #{tpu_custom_call.1} parent=1 // pred_region
      %35 = vst [vmem:[#allocation2] sm:$0xff] 0.0
    $region21: #{tpu_custom_call.1} parent=1 // pred_fallthru
      _
    %v36 = vld [vmem:[%s0] sm:$0xff]
    %v37 = vld [vmem:[%s1] sm:$0xff]
    %v38 = vlaneseq
    %v39 = vand.u32 %v38, 127
    %vm40 = vcmp.ge.s32.totalorder %v39, 1
    %41 = vset.pattern.permute.xlu0 0
    %42 = vperm.xlu0 %41, %v37
    %v43 = vpop.permute.xlu0 %42
    %vm44 = vcmp.lt.s32.totalorder %v39, %v43
    %vm45 = vmand %vm40, %vm44
    %v46 = vsel %vm45, %v36, 4294967295
    %v47 = vadd.s32 %v39, 128
    %s48 = smul.u32 0, 256
    %v49 = vstv %s48
    %v50 = vadd.s32 %v39, %v49
    %v51 = vadd.s32 %v47, %v49
    %52 = vset.pattern.permute.xlu0 1
    %53 = vperm.xlu0 %52, %v46
    %v54 = vpop.permute.xlu0 %53
    %vm55 = vcmp.eq.s32.totalorder %v54, %v50
    %vm56 = vcmp.eq.s32.totalorder %v54, %v51
    %v57 = vsel %vm55, 1, 0
    %v58 = vsel %vm56, 1, 0
    %v59 = vcvt.s32.f32 %v57
    %v60 = vcvt.s32.f32 %v58
    %v61 = vadd.f32 %v59, 0.0
    %v62 = vadd.f32 %v60, 0.0
    %63 = vset.pattern.permute.xlu0 2
    %64 = vperm.xlu0 %63, %v46
    %v65 = vpop.permute.xlu0 %64
    %vm66 = vcmp.eq.s32.totalorder %v65, %v50
    %vm67 = vcmp.eq.s32.totalorder %v65, %v51
    %v68 = vsel %vm66, 1, 0
    %v69 = vsel %vm67, 1, 0
    %v70 = vcvt.s32.f32 %v68
    %v71 = vcvt.s32.f32 %v69
    %v72 = vadd.f32 %v61, %v70
    %v73 = vadd.f32 %v62, %v71
    %74 = vset.pattern.permute.xlu0 3
    %75 = vperm.xlu0 %74, %v46
    %v76 = vpop.permute.xlu0 %75
    %vm77 = vcmp.eq.s32.totalorder %v76, %v50
    %vm78 = vcmp.eq.s32.totalorder %v76, %v51
    %v79 = vsel %vm77, 1, 0
    %v80 = vsel %vm78, 1, 0
    %v81 = vcvt.s32.f32 %v79
    %v82 = vcvt.s32.f32 %v80
    %v83 = vadd.f32 %v72, %v81
    %v84 = vadd.f32 %v73, %v82
    %85 = vset.pattern.permute.xlu0 4
    %86 = vperm.xlu0 %85, %v46
    %v87 = vpop.permute.xlu0 %86
    %vm88 = vcmp.eq.s32.totalorder %v87, %v50
    %vm89 = vcmp.eq.s32.totalorder %v87, %v51
    %v90 = vsel %vm88, 1, 0
    %v91 = vsel %vm89, 1, 0
    %v92 = vcvt.s32.f32 %v90
    %v93 = vcvt.s32.f32 %v91
    %v94 = vadd.f32 %v83, %v92
    %v95 = vadd.f32 %v84, %v93
    %96 = vset.pattern.permute.xlu0 5
    %97 = vperm.xlu0 %96, %v46
    %v98 = vpop.permute.xlu0 %97
    %vm99 = vcmp.eq.s32.totalorder %v98, %v50
    %vm100 = vcmp.eq.s32.totalorder %v98, %v51
    %v101 = vsel %vm99, 1, 0
    %v102 = vsel %vm100, 1, 0
    %v103 = vcvt.s32.f32 %v101
    %v104 = vcvt.s32.f32 %v102
    %v105 = vadd.f32 %v94, %v103
    %v106 = vadd.f32 %v95, %v104
    %107 = vset.pattern.permute.xlu0 6
    %108 = vperm.xlu0 %107, %v46
    %v109 = vpop.permute.xlu0 %108
    %vm110 = vcmp.eq.s32.totalorder %v109, %v50
    %vm111 = vcmp.eq.s32.totalorder %v109, %v51
    %v112 = vsel %vm110, 1, 0
    %v113 = vsel %vm111, 1, 0
    %v114 = vcvt.s32.f32 %v112
    %v115 = vcvt.s32.f32 %v113
    %v116 = vadd.f32 %v105, %v114
    %v117 = vadd.f32 %v106, %v115
    %118 = vset.pattern.permute.xlu0 7
    %119 = vperm.xlu0 %118, %v46
    %v120 = vpop.permute.xlu0 %119
    %vm121 = vcmp.eq.s32.totalorder %v120, %v50
    %vm122 = vcmp.eq.s32.totalorder %v120, %v51
    %v123 = vsel %vm121, 1, 0
    %v124 = vsel %vm122, 1, 0
    %v125 = vcvt.s32.f32 %v123
    %v126 = vcvt.s32.f32 %v124
    %v127 = vadd.f32 %v116, %v125
    %v128 = vadd.f32 %v117, %v126
    %v129 = vld [vmem:[#allocation2] sm:$0xff]
    %v130 = vld [vmem:[#allocation3] sm:$0xff]
    %v131 = vld [vmem:[#allocation3 + $0x8] sm:$0xff]
    %v132 = vld [vmem:[#allocation3 + $0x10] sm:$0xff]
    %v133 = vld [vmem:[#allocation3 + $0x18] sm:$0xff]
    %v134 = vld [vmem:[#allocation3 + $0x20] sm:$0xff]
    %v135 = vld [vmem:[#allocation3 + $0x28] sm:$0xff]
    %v136 = vld [vmem:[#allocation3 + $0x30] sm:$0xff]
    %v137 = vld [vmem:[#allocation3 + $0x38] sm:$0xff]
    %v138 = vld [vmem:[#allocation3 + $0x40] sm:$0xff]
    %v139 = vld [vmem:[#allocation3 + $0x48] sm:$0xff]
    %v140 = vld [vmem:[#allocation3 + $0x50] sm:$0xff]
    %v141 = vld [vmem:[#allocation3 + $0x58] sm:$0xff]
    %v142 = vld [vmem:[#allocation3 + $0x60] sm:$0xff]
    %v143 = vld [vmem:[#allocation3 + $0x68] sm:$0xff]
    %v144 = vld [vmem:[#allocation3 + $0x70] sm:$0xff]
    %v145 = vld [vmem:[#allocation3 + $0x78] sm:$0xff]
    %v146 = vld [vmem:[#allocation3 + $0x80] sm:$0xff]
    %v147 = vld [vmem:[#allocation3 + $0x88] sm:$0xff]
    %v148 = vld [vmem:[#allocation3 + $0x90] sm:$0xff]
    %v149 = vld [vmem:[#allocation3 + $0x98] sm:$0xff]
    %v150 = vld [vmem:[#allocation3 + $0xa0] sm:$0xff]
    %v151 = vld [vmem:[#allocation3 + $0xa8] sm:$0xff]
    %v152 = vld [vmem:[#allocation3 + $0xb0] sm:$0xff]
    %v153 = vld [vmem:[#allocation3 + $0xb8] sm:$0xff]
    %v154 = vld [vmem:[#allocation3 + $0xc0] sm:$0xff]
    %v155 = vld [vmem:[#allocation3 + $0xc8] sm:$0xff]
    %v156 = vld [vmem:[#allocation3 + $0xd0] sm:$0xff]
    %v157 = vld [vmem:[#allocation3 + $0xd8] sm:$0xff]
    %v158 = vld [vmem:[#allocation3 + $0xe0] sm:$0xff]
    %v159 = vld [vmem:[#allocation3 + $0xe8] sm:$0xff]
    %v160 = vld [vmem:[#allocation3 + $0xf0] sm:$0xff]
    %v161 = vld [vmem:[#allocation3 + $0xf8] sm:$0xff]
    %162 = vmatpush.msra.mxu0 %v145
    %163 = vmatpush.msra.mxu0 %v144
    %164 = vmatpush.msra.mxu0 %v143
    %165 = vmatpush.msra.mxu0 %v142
    %166 = vmatpush.msra.mxu0 %v141
    %167 = vmatpush.msra.mxu0 %v140
    %168 = vmatpush.msra.mxu0 %v139
    %169 = vmatpush.msra.mxu0 %v138
    %170 = vmatpush.msra.mxu0 %v137
    %171 = vmatpush.msra.mxu0 %v136
    %172 = vmatpush.msra.mxu0 %v135
    %173 = vmatpush.msra.mxu0 %v134
    %174 = vmatpush.msra.mxu0 %v133
    %175 = vmatpush.msra.mxu0 %v132
    %176 = vmatpush.msra.mxu0 %v131
    %177 = vmatpush.msra.mxu0 %v130
    %178 = vmatmul.f32.gmra.mxu0 %v127
    %v179 = vpop.f32.mrf.mxu0
    %v180 = vadd.f32 0.0, %v179
    %181 = vdwg.mxu0
    %182 = vmatpush.msra.mxu0 %v161
    %183 = vmatpush.msra.mxu0 %v160
    %184 = vmatpush.msra.mxu0 %v159
    %185 = vmatpush.msra.mxu0 %v158
    %186 = vmatpush.msra.mxu0 %v157
    %187 = vmatpush.msra.mxu0 %v156
    %188 = vmatpush.msra.mxu0 %v155
    %189 = vmatpush.msra.mxu0 %v154
    %190 = vmatpush.msra.mxu0 %v153
    %191 = vmatpush.msra.mxu0 %v152
    %192 = vmatpush.msra.mxu0 %v151
    %193 = vmatpush.msra.mxu0 %v150
    %194 = vmatpush.msra.mxu0 %v149
    %195 = vmatpush.msra.mxu0 %v148
    %196 = vmatpush.msra.mxu0 %v147
    %197 = vmatpush.msra.mxu0 %v146
    %198 = vmatmul.f32.gmra.mxu0 %v128
    %v199 = vpop.f32.mrf.mxu0
    %v200 = vadd.f32 %v180, %v199
    %201 = vdwg.mxu0
    %v202 = vadd.f32 %v129, %v200
    %203 = vst [vmem:[#allocation2] sm:$0xff] %v202
    // Predicated region
    $region22: #{tpu_custom_call.1} parent=1 // pred_check
      %p204 = pneg %p31
    $region23: #{tpu_custom_call.1} parent=1 // pred_check_branch
      %206 = sbr.rel (%p204) target = $region25
    $region24: #{tpu_custom_call.1} parent=1 // pred_region
      %vm207 = vcmp.gt.s32.totalorder %v37, 1
      %v208 = vsel %vm207, %v37, 1
      %v209 = vcvt.s32.f32 %v208
      %v210 = vrcp.pop %v209
      %v211 = vmul.f32 %v209, %v210
      %v212 = vsub.f32 1.0, %v211
      %v213 = vmul.f32 %v210, %v212
      %v214 = vadd.f32 %v210, %v213
      %vm215 = vweird.f32 %v209
      %vm216 = vweird.f32 %v210
      %vm217 = vmor %vm215, %vm216
      %v218 = vsel %vm217, %v210, %v214
      %v219 = vand.u32 2147483647, %v209
      %vm220 = vcmp.eq.f32.partialorder %v219, 8.507059e+37
      %v221 = vand.u32 %v209, 2147483648
      %v222 = vor.u32 1.1754944e-38, %v221
      %v223 = vsel %vm220, %v222, %v218
      %v224 = vmul.f32 1.0, %v223
      %v225 = vld [vmem:[#allocation2] sm:$0xff]
      %227 = vset.pattern.permute.xlu0 0
      %228 = vperm.xlu0 %227, %v224
      %v229 = vpop.permute.xlu0 %228
      %v231 = vmul.f32 %v225, %v229
      %232 = vst [vmem:[#allocation6] sm:$0xff] %v231
    $region25: #{tpu_custom_call.1} parent=1 // pred_fallthru
      _
    // Predicated region
    $region26: #{tpu_custom_call.1} parent=1 // pred_check
      _
    $region27: #{tpu_custom_call.1} parent=1 // pred_check_branch
      %234 = sbr.rel (0) target = $region29
    $region28: #{tpu_custom_call.1} parent=1 // pred_region
      %236 = vsyncadd [#allocation5], 0
      %s238 = sshll.u32 [#allocation6], 4
      %s239 = int_to_ptr.vmem [resolvable:$true] %s238
      %s240 = sshll.u32 %s3, 4
      %s241 = int_to_ptr.hbm [resolvable:$true] %s240
      %243 = dma.vmem_to_hbm [thread:$0]  %s239, 128, %s241, [#allocation5]
    $region29: #{tpu_custom_call.1} parent=1 // pred_fallthru
      _
    // Predicated region
    $region30: #{tpu_custom_call.1} parent=1 // pred_check
      _
    $region31: #{tpu_custom_call.1} parent=1 // pred_check_branch
      %245 = sbr.rel (0) target = $region33
    $region32: #{tpu_custom_call.1} parent=1 // pred_region
      %247 = dma.done [#allocation5], 128
    $region33: #{tpu_custom_call.1} parent=1 // pred_fallthru
      _
    %248 = vsyncpa [#allocation4], 1
    %249 = vsyncpa [#allocation5], 1

</llo_original>
